<compile_context>
chip_gen: v7x
topology: tpu7x:2x2x1
jax: 0.10.0
libtpu: 0.0.40
codegen_flags: <defaults>
</compile_context>

<pallas_src>
import math

import jax
import jax.numpy as jnp
import numpy as np
from jax.experimental import pallas as pl
from jax.experimental.pallas import tpu as pltpu


def _round_up(a, m):
    return ((a + m - 1) // m) * m


def _hogc_kernel(x_ref, r_ref, w_ref, b_ref, o_ref):
    # x_ref: (1, C_in, tl)      io_dtype, positions on lanes
    # r_ref: (1, tl)            f32 per-position scale = rowsum(gso)[node]
    # w_ref: (K1, c_out, C_in)  f32, resident
    # b_ref: (c_out, 1)         f32, resident
    # o_ref: (1, c_out, tl)     io_dtype
    k1 = w_ref.shape[0]

    x = x_ref[0, :, :].astype(jnp.float32)                       # (C_in, tl)
    # One sublane broadcast of the scale row per tile (cheap, hidden under DMA).
    # TODO(synk): could become a stride-0 broadcast load if r were stored with
    # >= C_in sublanes; kept as a single jnp broadcast per tile here.
    r = jnp.broadcast_to(r_ref[...].astype(jnp.float32), x.shape)  # (C_in, tl)

    # k = 0 term (r^0 == 1): plain matmul.
    acc = jnp.dot(w_ref[0].astype(jnp.float32), x,
                  preferred_element_type=jnp.float32)             # (c_out, tl)

    # Per-k accumulate (K1 is tiny -> static unroll); no concatenated operand,
    # no vreg spill, v5e-friendly (single vst slot stays free for the output).
    xk = x
    for k in range(1, k1):
        xk = xk * r                                               # x * r^k
        acc = acc + jnp.dot(w_ref[k].astype(jnp.float32), xk,
                            preferred_element_type=jnp.float32)

    acc = acc + b_ref[...].astype(jnp.float32)                    # bias bcast over lanes
    o_ref[0, :, :] = acc.astype(o_ref.dtype)


def high_order_graph_conv(x, gso, weights, bias, *, tile_tn=32768, io_dtype=None,
                          vmem_limit_bytes=48 * 1024 * 1024):
    """x: (B, c_in, T, N) -> (B, c_out, T, N).

    io_dtype: dtype used for the x / out HBM streams (e.g. jnp.bfloat16 to halve
    the dominant HBM traffic); accumulation is always f32. Defaults to x.dtype.
    """
    B, C_in, T, N = x.shape
    K1, c_in, c_out = weights.shape
    assert c_in == C_in and gso.shape == (N, N)
    if bias is None:
        bias = jnp.zeros((c_out,), jnp.float32)
    io_dtype = x.dtype if io_dtype is None else jnp.dtype(io_dtype)

    TN = T * N
    # Lane-dense tile (multiple of 128); no padding of the array — Pallas clips
    # the ragged final block on load/store.
    tl = min(_round_up(TN, 128), _round_up(max(tile_tn, 128), 128))
    n_tiles = pl.cdiv(TN, tl)
    # v7x megacore (2 TensorCores): prefer an even grid-step count when B is odd.
    if B % 2 == 1 and n_tiles % 2 == 1 and TN > 128:
        tl_even = _round_up(pl.cdiv(TN, n_tiles + 1), 128)
        if pl.cdiv(TN, tl_even) % 2 == 0:
            tl, n_tiles = tl_even, pl.cdiv(TN, tl_even)

    # Native layout: only reshapes (free) — no pad / slice HBM passes.
    x_flat = x.reshape(B, C_in, TN)
    if x_flat.dtype != io_dtype:
        x_flat = x_flat.astype(io_dtype)

    # Per-node scalar implied by einsum('hi,bthj->bthj', gso, x): rowsum(gso).
    # Stream a single f32 row (tiny next to the C_in + c_out channel rows); the
    # kernel rebuilds r^k by repeated multiplies. Position p = t*N + n.
    r_node = jnp.sum(gso, axis=1).astype(jnp.float32)              # (N,)
    r_pos = jnp.tile(r_node[None, :], (1, T))                      # (1, T*N)

    # Weights laid out so w_ref[k] is the (c_out, C_in) matrix for order k.
    w_k = jnp.transpose(weights, (0, 2, 1)).astype(jnp.float32)    # (K1, c_out, C_in)
    bias2d = bias.reshape(c_out, 1).astype(jnp.float32)

    io_bytes = jnp.dtype(io_dtype).itemsize
    cost = pl.CostEstimate(
        flops=2 * B * TN * c_out * K1 * C_in,
        transcendentals=0,
        bytes_accessed=(B * TN * (C_in + c_out) * io_bytes        # x + out streams
                        + B * n_tiles * tl * 4                     # r row per step
                        + 4 * (K1 * c_out * C_in + c_out)))        # resident params

    out_flat = pl.pallas_call(
        _hogc_kernel,
        out_shape=jax.ShapeDtypeStruct((B, c_out, TN), io_dtype),
        grid_spec=pltpu.PrefetchScalarGridSpec(
            num_scalar_prefetch=0,
            grid=(B, n_tiles),
            in_specs=[
                pl.BlockSpec((1, C_in, tl), lambda b, j: (b, 0, j)),
                pl.BlockSpec((1, tl), lambda b, j: (0, j)),
                pl.BlockSpec((K1, c_out, C_in), lambda b, j: (0, 0, 0)),  # resident
                pl.BlockSpec((c_out, 1), lambda b, j: (0, 0)),            # resident
            ],
            out_specs=pl.BlockSpec((1, c_out, tl), lambda b, j: (b, 0, j)),
        ),
        compiler_params=pltpu.CompilerParams(
            dimension_semantics=("parallel", "parallel"),
            vmem_limit_bytes=vmem_limit_bytes),
        cost_estimate=cost,
    )(x_flat, r_pos, w_k, bias2d)

    return out_flat.reshape(B, c_out, T, N)


if __name__ == "__main__":
    B, C_in, C_out, T, N, order = 2, 4, 8, 8, 16, 2

    key = jax.random.PRNGKey(0)
    k1, k2, k3, k4 = jax.random.split(key, 4)

    x = jax.random.normal(k1, (B, C_in, T, N), jnp.float32)
    # Unnormalized gso (rowsums differ per node) so the order/k handling and
    # the power construction are actually exercised.
    gso = jax.random.uniform(k2, (N, N), jnp.float32) * (3.0 / N)

    # deterministic params mimicking kaiming_uniform_(a=sqrt(5)) / bias init
    fan_in = C_in * C_out
    w_bound = 1.0 / math.sqrt(fan_in)
    weights = jax.random.uniform(
        k3, (order + 1, C_in, C_out), jnp.float32, -w_bound, w_bound
    )
    b_bound = 1.0 / math.sqrt(C_in)  # 1 / sqrt(weights.shape[1])
    bias = jax.random.uniform(k4, (C_out,), jnp.float32, -b_bound, b_bound)

    # pure-JAX reference reproducing the PyTorch forward exactly
    xr = jnp.transpose(x, (0, 2, 3, 1))
    xs = [xr]
    for k in range(1, order + 1):
        xs.append(jnp.einsum("hi,bthj->bthj", gso, xs[k - 1]))
    xo = jnp.stack(xs, axis=2)
    ref = jnp.einsum("btkhi,kij->bthj", xo, weights) + bias
    ref = jnp.transpose(ref, (0, 3, 1, 2))

    # f32 path (matches the module's dtype exactly)
    out = jax.block_until_ready(high_order_graph_conv(x, gso, weights, bias))
    np.testing.assert_allclose(np.asarray(out), np.asarray(ref), rtol=1e-4, atol=1e-4)
    assert out.shape == (B, C_out, T, N)

    # bf16 I/O path (HBM-bound -> halve the x/out streams), f32 accumulation.
    out_bf16 = jax.block_until_ready(
        high_order_graph_conv(x, gso, weights, bias, io_dtype=jnp.bfloat16))
    np.testing.assert_allclose(np.asarray(out_bf16, dtype=np.float32),
                               np.asarray(ref), rtol=5e-2, atol=5e-2)

    print("KERNEL_OK")
</pallas_src>

<mosaic_0001>
module attributes {stable_mosaic.version = 11 : i64} {
  func.func @_hogc_kernel(%arg0: i32, %arg1: i32, %arg2: memref<1x4x128xf32, #tpu.memory_space<vmem>>, %arg3: memref<1x128xf32, #tpu.memory_space<vmem>>, %arg4: memref<3x8x4xf32, #tpu.memory_space<vmem>>, %arg5: memref<8x1xf32, #tpu.memory_space<vmem>>, %arg6: memref<1x8x128xf32, #tpu.memory_space<vmem>>) attributes {dimension_semantics = [#tpu.dimension_semantics<parallel>, #tpu.dimension_semantics<parallel>], iteration_bounds = array<i64: 2, 1>, scalar_prefetch = 0 : i64, scratch_operands = 0 : i64, tpu.core_type = #tpu.core_type<tc>, window_params = [{transform_indices = @transform_0, window_bounds = array<i64: 1, 4, 128>}, {transform_indices = @transform_1, window_bounds = array<i64: 1, 128>}, {pipeline_mode = #tpu.pipeline_mode<synchronous>, transform_indices = @transform_2, window_bounds = array<i64: 3, 8, 4>}, {pipeline_mode = #tpu.pipeline_mode<synchronous>, transform_indices = @transform_3, window_bounds = array<i64: 8, 1>}, {transform_indices = @transform_4, window_bounds = array<i64: 1, 8, 128>}]} {
    %c0 = arith.constant 0 : index
    %c0_0 = arith.constant 0 : index
    %c0_1 = arith.constant 0 : index
    %0 = vector.load %arg2[%c0, %c0_0, %c0_1] : memref<1x4x128xf32, #tpu.memory_space<vmem>>, vector<1x4x128xf32>
    %1 = vector.shape_cast %0 : vector<1x4x128xf32> to vector<4x128xf32>
    %c0_2 = arith.constant 0 : index
    %c0_3 = arith.constant 0 : index
    %2 = vector.load %arg3[%c0_2, %c0_3] : memref<1x128xf32, #tpu.memory_space<vmem>>, vector<1x128xf32>
    %3 = vector.shape_cast %2 : vector<1x128xf32> to vector<1x128xf32>
    %4 = vector.broadcast %3 : vector<1x128xf32> to vector<4x128xf32>
    %c0_4 = arith.constant 0 : index
    %c0_5 = arith.constant 0 : index
    %c0_6 = arith.constant 0 : index
    %5 = vector.load %arg4[%c0_4, %c0_5, %c0_6] : memref<3x8x4xf32, #tpu.memory_space<vmem>>, vector<1x8x4xf32>
    %6 = vector.shape_cast %5 : vector<1x8x4xf32> to vector<8x4xf32>
    %cst = arith.constant dense<0.000000e+00> : vector<8x128xf32>
    %7 = tpu.matmul %6, %1, %cst {dimension_numbers = #tpu.dot_dimension_numbers<[1], [0], [0], [1], [0, 0, 1, 1], [], []>} : vector<8x4xf32>, vector<4x128xf32>, vector<8x128xf32> -> vector<8x128xf32>
    %8 = arith.mulf %1, %4 : vector<4x128xf32>
    %c1 = arith.constant 1 : index
    %c0_7 = arith.constant 0 : index
    %c0_8 = arith.constant 0 : index
    %9 = vector.load %arg4[%c1, %c0_7, %c0_8] : memref<3x8x4xf32, #tpu.memory_space<vmem>>, vector<1x8x4xf32>
    %10 = vector.shape_cast %9 : vector<1x8x4xf32> to vector<8x4xf32>
    %cst_9 = arith.constant dense<0.000000e+00> : vector<8x128xf32>
    %11 = tpu.matmul %10, %8, %cst_9 {dimension_numbers = #tpu.dot_dimension_numbers<[1], [0], [0], [1], [0, 0, 1, 1], [], []>} : vector<8x4xf32>, vector<4x128xf32>, vector<8x128xf32> -> vector<8x128xf32>
    %12 = arith.addf %7, %11 : vector<8x128xf32>
    %13 = arith.mulf %8, %4 : vector<4x128xf32>
    %c2 = arith.constant 2 : index
    %c0_10 = arith.constant 0 : index
    %c0_11 = arith.constant 0 : index
    %14 = vector.load %arg4[%c2, %c0_10, %c0_11] : memref<3x8x4xf32, #tpu.memory_space<vmem>>, vector<1x8x4xf32>
    %15 = vector.shape_cast %14 : vector<1x8x4xf32> to vector<8x4xf32>
    %cst_12 = arith.constant dense<0.000000e+00> : vector<8x128xf32>
    %16 = tpu.matmul %15, %13, %cst_12 {dimension_numbers = #tpu.dot_dimension_numbers<[1], [0], [0], [1], [0, 0, 1, 1], [], []>} : vector<8x4xf32>, vector<4x128xf32>, vector<8x128xf32> -> vector<8x128xf32>
    %17 = arith.addf %12, %16 : vector<8x128xf32>
    %c0_13 = arith.constant 0 : index
    %c0_14 = arith.constant 0 : index
    %18 = vector.load %arg5[%c0_13, %c0_14] : memref<8x1xf32, #tpu.memory_space<vmem>>, vector<8x1xf32>
    %19 = vector.broadcast %18 : vector<8x1xf32> to vector<8x128xf32>
    %20 = arith.addf %17, %19 : vector<8x128xf32>
    %c0_15 = arith.constant 0 : index
    %c0_16 = arith.constant 0 : index
    %c0_17 = arith.constant 0 : index
    %21 = vector.load %arg6[%c0_15, %c0_16, %c0_17] : memref<1x8x128xf32, #tpu.memory_space<vmem>>, vector<1x8x128xf32>
    %22 = vector.shape_cast %21 : vector<1x8x128xf32> to vector<8x128xf32>
    %23 = vector.shape_cast %20 : vector<8x128xf32> to vector<1x8x128xf32>
    tpu.vector_store %arg6[%c0_15, %c0_16, %c0_17], %23 {strides = array<i32>} : memref<1x8x128xf32, #tpu.memory_space<vmem>>, vector<1x8x128xf32>,
    return
  }
  func.func @transform_0(%arg0: i32, %arg1: i32) -> (i32, i32, i32) {
    %c0_i32 = arith.constant 0 : i32
    %c0_i32_0 = arith.constant 0 : i32
    return %arg0, %c0_i32, %arg1 : i32, i32, i32
  }
  func.func @transform_1(%arg0: i32, %arg1: i32) -> (i32, i32) {
    %c0_i32 = arith.constant 0 : i32
    %c0_i32_0 = arith.constant 0 : i32
    return %c0_i32, %arg1 : i32, i32
  }
  func.func @transform_2(%arg0: i32, %arg1: i32) -> (i32, i32, i32) {
    %c0_i32 = arith.constant 0 : i32
    %c0_i32_0 = arith.constant 0 : i32
    %c0_i32_1 = arith.constant 0 : i32
    %c0_i32_2 = arith.constant 0 : i32
    return %c0_i32, %c0_i32_0, %c0_i32_1 : i32, i32, i32
  }
  func.func @transform_3(%arg0: i32, %arg1: i32) -> (i32, i32) {
    %c0_i32 = arith.constant 0 : i32
    %c0_i32_0 = arith.constant 0 : i32
    %c0_i32_1 = arith.constant 0 : i32
    return %c0_i32, %c0_i32_0 : i32, i32
  }
  func.func @transform_4(%arg0: i32, %arg1: i32) -> (i32, i32, i32) {
    %c0_i32 = arith.constant 0 : i32
    %c0_i32_0 = arith.constant 0 : i32
    return %arg0, %c0_i32, %arg1 : i32, i32, i32
  }
}

</mosaic_0001>

<llo_original>
// kernel: tpu_custom_call.1
$region0: #{tpu_custom_call.1}
  #allocation0 [shape = 'u32[]', space=smem, size = 0x4, offset = 0x4, fixed_abs, tag = 'smem constant byte address 0x4 - core index']
  #allocation1 [shape = 'u32[144,128]{1,0:T(1,128)}', space=vmem, size = 0x12000, scoped, tag = 'internal scratch']
  %s0 = inlined_call_operand.vmem [shape: f32[2,4,128], index: 0, kind: input, shape index: {}]
  %s1 = inlined_call_operand.vmem [shape: f32[1,128], index: 1, kind: input, shape index: {}]
  %s2 = inlined_call_operand.vmem [shape: f32[3,8,4], index: 2, kind: input, shape index: {}]
  %s3 = inlined_call_operand.vmem [shape: f32[8,1], index: 3, kind: input, shape index: {}]
  %s4 = inlined_call_operand.hbm [shape: f32[2,8,128], index: 4, kind: output, shape index: {}]
  %s5 = sld [smem:[#allocation0]]
  $region49: #{tpu_custom_call.1} parent=0
    _
  %s7 = ssub.s32 1, %s5
  %s8 = scalar_select 0, %s7, %s5
  $region1: #{tpu_custom_call.1} parent=0
    #allocation2 [shape = 'u8[8192]{0}', space=vmem, size = 0x2000, scoped, tag = 'output window, operand 0']
    #allocation3 [shape = 's32[2]{0}', space=sflag, size = 0x8, scoped, tag = 'scoped memory for tpu_custom_call.1']
    %9 = vsyncpa [#allocation3], 0
    %s10 = scalar_lea.sflag [#allocation3], 1
    %11 = vsyncpa %s10, 0
    loop: start=0, step=1, limit=4
    $region2: #{tpu_custom_call.1} parent=1 // loop_pre_header
      _
    $region3: #{tpu_custom_call.1} parent=1 // loop_header
      %s13 = sphi 0, %s17
      %p14 = scmp.ge.s32.totalorder %s13, 4
      %s20 = sphi 0, %s32
      %s21 = sphi 0, %s28
      %s22 = sphi 0, %s20
      %s23 = sphi 0, %s21
      %s24 = sphi 0, %s22
      %s25 = sphi 0, %s23
      %s37 = sphi 0, %s39
      %s40 = sphi 0, %s37
      %s41 = sphi 0, %s40
      %s57 = sphi 0, %s41
      %s63 = sphi 0, %s65
      %s66 = sphi 0, %s63
      %s67 = sphi 0, %s66
      %s83 = sphi 0, %s67
      %s87 = sphi 0, %s87
      %s89 = sphi 0, %s87
      %s90 = sphi 0, %s89
      %s104 = sphi 0, %s90
      %s108 = sphi 0, %s108
      %s110 = sphi 0, %s108
      %s111 = sphi 0, %s110
      %s125 = sphi 0, %s111
      %s133 = sphi 0, %s135
      %s136 = sphi 0, %s133
      %s137 = sphi 0, %s136
      %s153 = sphi 0, %s137
    $region4: #{tpu_custom_call.1} parent=1 // loop_header_branch
      %16 = sbr.rel (%p14) target = $region8
    $region5: #{tpu_custom_call.1} parent=1 // loop_body
      %s18 = ssub.s32 %s13, 1
      %s19 = ssub.s32 %s13, 2
      %s26 = sadd.s32 1, %s21
      %p27 = scmp.ge.s32.totalorder %s26, 1
      %s28 = scalar_select %p27, 0, %s26
      %s29 = sadd.s32 1, %s20
      %s30 = scalar_select %p27, %s29, %s20
      %p31 = scmp.ge.s32.totalorder %s30, 2
      %s32 = scalar_select %p31, 0, %s30
      %s33 = ssub.s32 %s20, %s32
      %s34 = ssub.s32 %s21, %s28
      %s35 = sor.u32 %s33, %s34
      %p36 = scmp.eq.s32.totalorder %s35, 0
      %s38 = sadd.s32 %s37, 1
      %s39 = scalar_select %p36, %s37, %s38
      %p42 = pneg %p36
      %p43 = scmp.eq.s32.totalorder %s13, 1
      %p44 = por %p42, %p43
      %p45 = scmp.ne.s32.totalorder %s37, %s40
      %p46 = scmp.eq.s32.totalorder %s13, 0
      %p47 = por %p45, %p46
      %p48 = scmp.ne.s32.totalorder %s37, %s40
      %p49 = scmp.eq.s32.totalorder %s18, 1
      %p50 = por %p48, %p49
      %p51 = scmp.ne.s32.totalorder %s40, %s41
      %p52 = scmp.eq.s32.totalorder %s18, 0
      %p53 = por %p51, %p52
      %p54 = scmp.ne.s32.totalorder %s40, %s41
      %p55 = scmp.eq.s32.totalorder %s19, 1
      %p56 = por %p54, %p55
      %p58 = scmp.ne.s32.totalorder %s41, %s57
      %p59 = scmp.eq.s32.totalorder %s19, 0
      %p60 = por %p58, %p59
      %s61 = ssub.s32 %s21, %s28
      %p62 = scmp.eq.s32.totalorder %s61, 0
      %s64 = sadd.s32 %s63, 1
      %s65 = scalar_select %p62, %s63, %s64
      %p68 = pneg %p62
      %p69 = scmp.eq.s32.totalorder %s13, 1
      %p70 = por %p68, %p69
      %p71 = scmp.ne.s32.totalorder %s63, %s66
      %p72 = scmp.eq.s32.totalorder %s13, 0
      %p73 = por %p71, %p72
      %p74 = scmp.ne.s32.totalorder %s63, %s66
      %p75 = scmp.eq.s32.totalorder %s18, 1
      %p76 = por %p74, %p75
      %p77 = scmp.ne.s32.totalorder %s66, %s67
      %p78 = scmp.eq.s32.totalorder %s18, 0
      %p79 = por %p77, %p78
      %p80 = scmp.ne.s32.totalorder %s66, %s67
      %p81 = scmp.eq.s32.totalorder %s19, 1
      %p82 = por %p80, %p81
      %p84 = scmp.ne.s32.totalorder %s67, %s83
      %p85 = scmp.eq.s32.totalorder %s19, 0
      %p86 = por %p84, %p85
      %s88 = sadd.s32 %s87, 1
      %p91 = scmp.eq.s32.totalorder %s13, 1
      %p92 = scmp.ne.s32.totalorder %s87, %s89
      %p93 = scmp.eq.s32.totalorder %s13, 0
      %p94 = por %p92, %p93
      %p95 = scmp.ne.s32.totalorder %s87, %s89
      %p96 = scmp.eq.s32.totalorder %s18, 1
      %p97 = por %p95, %p96
      %p98 = scmp.ne.s32.totalorder %s89, %s90
      %p99 = scmp.eq.s32.totalorder %s18, 0
      %p100 = por %p98, %p99
      %p101 = scmp.ne.s32.totalorder %s89, %s90
      %p102 = scmp.eq.s32.totalorder %s19, 1
      %p103 = por %p101, %p102
      %p105 = scmp.ne.s32.totalorder %s90, %s104
      %p106 = scmp.eq.s32.totalorder %s19, 0
      %p107 = por %p105, %p106
      %s109 = sadd.s32 %s108, 1
      %p112 = scmp.eq.s32.totalorder %s13, 1
      %p113 = scmp.ne.s32.totalorder %s108, %s110
      %p114 = scmp.eq.s32.totalorder %s13, 0
      %p115 = por %p113, %p114
      %p116 = scmp.ne.s32.totalorder %s108, %s110
      %p117 = scmp.eq.s32.totalorder %s18, 1
      %p118 = por %p116, %p117
      %p119 = scmp.ne.s32.totalorder %s110, %s111
      %p120 = scmp.eq.s32.totalorder %s18, 0
      %p121 = por %p119, %p120
      %p122 = scmp.ne.s32.totalorder %s110, %s111
      %p123 = scmp.eq.s32.totalorder %s19, 1
      %p124 = por %p122, %p123
      %p126 = scmp.ne.s32.totalorder %s111, %s125
      %p127 = scmp.eq.s32.totalorder %s19, 0
      %p128 = por %p126, %p127
      %s129 = ssub.s32 %s20, %s32
      %s130 = ssub.s32 %s21, %s28
      %s131 = sor.u32 %s129, %s130
      %p132 = scmp.eq.s32.totalorder %s131, 0
      %s134 = sadd.s32 %s133, 1
      %s135 = scalar_select %p132, %s133, %s134
      %p138 = pneg %p132
      %p139 = scmp.eq.s32.totalorder %s13, 1
      %p140 = por %p138, %p139
      %p141 = scmp.ne.s32.totalorder %s133, %s136
      %p142 = scmp.eq.s32.totalorder %s13, 0
      %p143 = por %p141, %p142
      %p144 = scmp.ne.s32.totalorder %s133, %s136
      %p145 = scmp.eq.s32.totalorder %s18, 1
      %p146 = por %p144, %p145
      %p147 = scmp.ne.s32.totalorder %s136, %s137
      %p148 = scmp.eq.s32.totalorder %s18, 0
      %p149 = por %p147, %p148
      %p150 = scmp.ne.s32.totalorder %s136, %s137
      %p151 = scmp.eq.s32.totalorder %s19, 1
      %p152 = por %p150, %p151
      %p154 = scmp.ne.s32.totalorder %s137, %s153
      %p155 = scmp.eq.s32.totalorder %s19, 0
      %p156 = por %p154, %p155
      %p157 = scmp.le.s32.totalorder 1, %s13
      %p158 = scmp.lt.s32.totalorder %s13, 3
      %p159 = pnand %p157, %p158
      %p160 = pneg %p159
      // Predicated region
      $region9: #{tpu_custom_call.1} parent=5 // pred_check
        _
      $region10: #{tpu_custom_call.1} parent=5 // pred_check_branch
        %162 = sbr.rel (%p159) target = $region12
      $region11: #{tpu_custom_call.1} parent=5 // pred_region
        %s163 = ssub.s32 %s13, 1
        // Predicated region
        $region13: #{tpu_custom_call.1} parent=11 // pred_check
          %p164 = pneg %p79
        $region14: #{tpu_custom_call.1} parent=11 // pred_check_branch
          %166 = sbr.rel (%p164) target = $region16
        $region15: #{tpu_custom_call.1} parent=11 // pred_region
          %p167 = scmp.lt.s32.totalorder %s23, 0
          %s168 = scalar_select %p167, %s23, 0
          %s169 = scalar_lea.vmem %s1, %s168
        $region16: #{tpu_custom_call.1} parent=11 // pred_fallthru
          _
        // Predicated region
        $region17: #{tpu_custom_call.1} parent=11 // pred_check
          %p170 = pneg %p100
        $region18: #{tpu_custom_call.1} parent=11 // pred_check_branch
          %172 = sbr.rel (%p170) target = $region20
        $region19: #{tpu_custom_call.1} parent=11 // pred_region
          _
        $region20: #{tpu_custom_call.1} parent=11 // pred_fallthru
          _
        // Predicated region
        $region21: #{tpu_custom_call.1} parent=11 // pred_check
          %p173 = pneg %p121
        $region22: #{tpu_custom_call.1} parent=11 // pred_check_branch
          %175 = sbr.rel (%p173) target = $region24
        $region23: #{tpu_custom_call.1} parent=11 // pred_region
          _
        $region24: #{tpu_custom_call.1} parent=11 // pred_fallthru
          _
      $region12: #{tpu_custom_call.1} parent=5 // pred_fallthru
        _
      %p176 = scmp.lt.s32.totalorder %s13, 2
      // Predicated region
      $region25: #{tpu_custom_call.1} parent=5 // pred_check
        %p177 = pneg %p176
      $region26: #{tpu_custom_call.1} parent=5 // pred_check_branch
        %179 = sbr.rel (%p177) target = $region28
      $region27: #{tpu_custom_call.1} parent=5 // pred_region
        // Predicated region
        $region29: #{tpu_custom_call.1} parent=27 // pred_check
          %p180 = pneg %p47
        $region30: #{tpu_custom_call.1} parent=27 // pred_check_branch
          %182 = sbr.rel (%p180) target = $region32
        $region31: #{tpu_custom_call.1} parent=27 // pred_region
          %p183 = scmp.lt.s32.totalorder %s20, 1
          %s184 = scalar_select %p183, %s20, 1
          %p185 = scmp.lt.s32.totalorder %s21, 0
          %s186 = scalar_select %p185, %s21, 0
          %s187 = sadd.s32 %s186, %s184
          %s188 = smul.addr %s187, 4
          %s189 = scalar_lea.vmem %s0, %s188
        $region32: #{tpu_custom_call.1} parent=27 // pred_fallthru
          _
      $region28: #{tpu_custom_call.1} parent=5 // pred_fallthru
        _
      %p190 = scmp.le.s32.totalorder 1, %s13
      %p191 = scmp.lt.s32.totalorder %s13, 3
      %p192 = pnand %p190, %p191
      %p193 = pneg %p192
      // Predicated region
      $region33: #{tpu_custom_call.1} parent=5 // pred_check
        _
      $region34: #{tpu_custom_call.1} parent=5 // pred_check_branch
        %195 = sbr.rel (%p192) target = $region36
      $region35: #{tpu_custom_call.1} parent=5 // pred_region
        %s196 = ssub.s32 %s13, 1
        %p197 = scmp.lt.s32.totalorder %s22, 1
        %s198 = scalar_select %p197, %s22, 1
        %p199 = scmp.lt.s32.totalorder %s23, 0
        %s200 = scalar_select %p199, %s23, 0
        %s201 = sadd.s32 %s200, %s198
        %s202 = smul.addr %s201, 4
        %s203 = scalar_lea.vmem %s0, %s202
        %p204 = pneg %p53
        %p205 = pneg %p50
        %p206 = scmp.lt.s32.totalorder %s23, 0
        %s207 = scalar_select %p206, %s23, 0
        %s208 = scalar_lea.vmem %s1, %s207
        %p209 = pneg %p79
        %p210 = pneg %p76
        %p211 = pneg %p100
        %p212 = pneg %p97
        %p213 = pneg %p121
        %p214 = pneg %p118
        %p215 = pneg %p149
        %p216 = pneg %p146
        %s217 = sand.u32 %s136, 1
        %s218 = scalar_lea.sflag [#allocation3], %s217
        %s219 = sand.u32 %s136, 1
        %s220 = smul.addr %s219, 8
        %s221 = scalar_lea.vmem [#allocation2], %s220
        %p222 = scmp.lt.s32.totalorder %s22, 1
        %s223 = scalar_select %p222, %s22, 1
        %p224 = scmp.lt.s32.totalorder %s23, 0
        %s225 = scalar_select %p224, %s23, 0
        %s226 = sadd.s32 %s225, %s223
        %s227 = smul.addr %s226, 4
        %s228 = scalar_lea.vmem %s0, %s227
        %p229 = scmp.lt.s32.totalorder %s23, 0
        %s230 = scalar_select %p229, %s23, 0
        %s231 = scalar_lea.vmem %s1, %s230
        %v232 = vld [vmem:[%s228] sm:$0xf]
        %v233 = vld [vmem:[%s231] sm:$0x1]
        %v235 = vlaneseq
        %v236 = vshrl.u32 %v235, 7
        %v237 = vsub.s32 0, %v236
        %v238 = vrot.slane %v233, %v237
        %v240 = vld [vmem:[%s2] sm:$0xff]
        %v241 = vmul.f32 %v232, %v238
        %s242 = scalar_lea.vmem %s2, 8
        %v243 = vld [vmem:[%s242] sm:$0xff]
        %vm244 = vcmask 31744
        %v246 = vsel %vm244, %v243, 0
        %vm248 = vcmask 1043456
        %v250 = vsel %vm248, %v241, 0
        %252 = vmatprep.subr.mxu0 0.0
        %253 = vmatpush1.msra.mxu0 %v250
        %254 = vmatprep.subr.mxu0 0.0
        %255 = vmatpush1.msra.mxu0 0.0
        %256 = vmatprep.subr.mxu0 0.0
        %257 = vmatpush1.msra.mxu0 0.0
        %258 = vmatprep.subr.mxu0 0.0
        %259 = vmatpush1.msra.mxu0 0.0
        %260 = vmatprep.subr.mxu0 0.0
        %261 = vmatpush1.msra.mxu0 0.0
        %262 = vmatprep.subr.mxu0 0.0
        %263 = vmatpush1.msra.mxu0 0.0
        %264 = vmatprep.subr.mxu0 0.0
        %265 = vmatpush1.msra.mxu0 0.0
        %266 = vmatprep.subr.mxu0 0.0
        %267 = vmatpush1.msra.mxu0 0.0
        %268 = vmatprep.subr.mxu0 0.0
        %269 = vmatpush1.msra.mxu0 0.0
        %270 = vmatprep.subr.mxu0 0.0
        %271 = vmatpush1.msra.mxu0 0.0
        %272 = vmatprep.subr.mxu0 0.0
        %273 = vmatpush1.msra.mxu0 0.0
        %274 = vmatprep.subr.mxu0 0.0
        %275 = vmatpush1.msra.mxu0 0.0
        %276 = vmatprep.subr.mxu0 0.0
        %277 = vmatpush1.msra.mxu0 0.0
        %278 = vmatprep.subr.mxu0 0.0
        %279 = vmatpush1.msra.mxu0 0.0
        %280 = vmatprep.subr.mxu0 0.0
        %281 = vmatpush1.msra.mxu0 0.0
        %282 = vmatprep.subr.mxu0 0.0
        %283 = vmatpush1.msra.mxu0 0.0
        %284 = vmatprep.subr.mxu0 0.0
        %285 = vmatpush1.msra.mxu0 0.0
        %286 = vmatprep.subr.mxu0 0.0
        %287 = vmatpush1.msra.mxu0 0.0
        %288 = vmatprep.subr.mxu0 0.0
        %289 = vmatpush1.msra.mxu0 0.0
        %290 = vmatprep.subr.mxu0 0.0
        %291 = vmatpush1.msra.mxu0 0.0
        %292 = vmatprep.subr.mxu0 0.0
        %293 = vmatpush1.msra.mxu0 0.0
        %294 = vmatprep.subr.mxu0 0.0
        %295 = vmatpush1.msra.mxu0 0.0
        %296 = vmatprep.subr.mxu0 0.0
        %297 = vmatpush1.msra.mxu0 0.0
        %298 = vmatprep.subr.mxu0 0.0
        %299 = vmatpush1.msra.mxu0 0.0
        %300 = vmatprep.subr.mxu0 0.0
        %301 = vmatpush1.msra.mxu0 0.0
        %302 = vmatprep.subr.mxu0 0.0
        %303 = vmatpush1.msra.mxu0 0.0
        %304 = vmatprep.subr.mxu0 0.0
        %305 = vmatpush1.msra.mxu0 0.0
        %306 = vmatprep.subr.mxu0 0.0
        %307 = vmatpush1.msra.mxu0 0.0
        %308 = vmatprep.subr.mxu0 0.0
        %309 = vmatpush1.msra.mxu0 0.0
        %310 = vmatprep.subr.mxu0 0.0
        %311 = vmatpush1.msra.mxu0 0.0
        %312 = vmatprep.subr.mxu0 0.0
        %313 = vmatpush1.msra.mxu0 0.0
        %314 = vmatprep.subr.mxu0 0.0
        %315 = vmatpush1.msra.mxu0 0.0
        %316 = vmatprep.mubr.f32.mxu0 0.0
        %317 = vmatmul.mubr.f32.gmra.mrb[0].mxu0 %v246
        %v318 = vpop.f32.mrb[0].mxu0
        %v319 = vadd.f32 0.0, %v318
        %v320 = vpop.f32.mrb[0].mxu0
        %321 = vdwg.mxu0
        %v323 = vsel %vm244, %v240, 0
        %v326 = vsel %vm248, %v232, 0
        %328 = vmatprep.subr.mxu0 0.0
        %329 = vmatpush1.msra.mxu0 %v326
        %330 = vmatprep.subr.mxu0 0.0
        %331 = vmatpush1.msra.mxu0 0.0
        %332 = vmatprep.subr.mxu0 0.0
        %333 = vmatpush1.msra.mxu0 0.0
        %334 = vmatprep.subr.mxu0 0.0
        %335 = vmatpush1.msra.mxu0 0.0
        %336 = vmatprep.subr.mxu0 0.0
        %337 = vmatpush1.msra.mxu0 0.0
        %338 = vmatprep.subr.mxu0 0.0
        %339 = vmatpush1.msra.mxu0 0.0
        %340 = vmatprep.subr.mxu0 0.0
        %341 = vmatpush1.msra.mxu0 0.0
        %342 = vmatprep.subr.mxu0 0.0
        %343 = vmatpush1.msra.mxu0 0.0
        %344 = vmatprep.subr.mxu0 0.0
        %345 = vmatpush1.msra.mxu0 0.0
        %346 = vmatprep.subr.mxu0 0.0
        %347 = vmatpush1.msra.mxu0 0.0
        %348 = vmatprep.subr.mxu0 0.0
        %349 = vmatpush1.msra.mxu0 0.0
        %350 = vmatprep.subr.mxu0 0.0
        %351 = vmatpush1.msra.mxu0 0.0
        %352 = vmatprep.subr.mxu0 0.0
        %353 = vmatpush1.msra.mxu0 0.0
        %354 = vmatprep.subr.mxu0 0.0
        %355 = vmatpush1.msra.mxu0 0.0
        %356 = vmatprep.subr.mxu0 0.0
        %357 = vmatpush1.msra.mxu0 0.0
        %358 = vmatprep.subr.mxu0 0.0
        %359 = vmatpush1.msra.mxu0 0.0
        %360 = vmatprep.subr.mxu0 0.0
        %361 = vmatpush1.msra.mxu0 0.0
        %362 = vmatprep.subr.mxu0 0.0
        %363 = vmatpush1.msra.mxu0 0.0
        %364 = vmatprep.subr.mxu0 0.0
        %365 = vmatpush1.msra.mxu0 0.0
        %366 = vmatprep.subr.mxu0 0.0
        %367 = vmatpush1.msra.mxu0 0.0
        %368 = vmatprep.subr.mxu0 0.0
        %369 = vmatpush1.msra.mxu0 0.0
        %370 = vmatprep.subr.mxu0 0.0
        %371 = vmatpush1.msra.mxu0 0.0
        %372 = vmatprep.subr.mxu0 0.0
        %373 = vmatpush1.msra.mxu0 0.0
        %374 = vmatprep.subr.mxu0 0.0
        %375 = vmatpush1.msra.mxu0 0.0
        %376 = vmatprep.subr.mxu0 0.0
        %377 = vmatpush1.msra.mxu0 0.0
        %378 = vmatprep.subr.mxu0 0.0
        %379 = vmatpush1.msra.mxu0 0.0
        %380 = vmatprep.subr.mxu0 0.0
        %381 = vmatpush1.msra.mxu0 0.0
        %382 = vmatprep.subr.mxu0 0.0
        %383 = vmatpush1.msra.mxu0 0.0
        %384 = vmatprep.subr.mxu0 0.0
        %385 = vmatpush1.msra.mxu0 0.0
        %386 = vmatprep.subr.mxu0 0.0
        %387 = vmatpush1.msra.mxu0 0.0
        %388 = vmatprep.subr.mxu0 0.0
        %389 = vmatpush1.msra.mxu0 0.0
        %390 = vmatprep.subr.mxu0 0.0
        %391 = vmatpush1.msra.mxu0 0.0
        %392 = vmatprep.mubr.f32.mxu0 0.0
        %393 = vmatmul.mubr.f32.gmra.mrb[0].mxu0 %v323
        %v394 = vpop.f32.mrb[0].mxu0
        %v395 = vadd.f32 %v319, %v394
        %v396 = vpop.f32.mrb[0].mxu0
        %397 = vdwg.mxu0
        %v398 = vmul.f32 %v241, %v238
        %s399 = scalar_lea.vmem %s2, 16
        %v400 = vld [vmem:[%s399] sm:$0xff]
        %v402 = vsel %vm244, %v400, 0
        %v405 = vsel %vm248, %v398, 0
        %407 = vmatprep.subr.mxu0 0.0
        %408 = vmatpush1.msra.mxu0 %v405
        %409 = vmatprep.subr.mxu0 0.0
        %410 = vmatpush1.msra.mxu0 0.0
        %411 = vmatprep.subr.mxu0 0.0
        %412 = vmatpush1.msra.mxu0 0.0
        %413 = vmatprep.subr.mxu0 0.0
        %414 = vmatpush1.msra.mxu0 0.0
        %415 = vmatprep.subr.mxu0 0.0
        %416 = vmatpush1.msra.mxu0 0.0
        %417 = vmatprep.subr.mxu0 0.0
        %418 = vmatpush1.msra.mxu0 0.0
        %419 = vmatprep.subr.mxu0 0.0
        %420 = vmatpush1.msra.mxu0 0.0
        %421 = vmatprep.subr.mxu0 0.0
        %422 = vmatpush1.msra.mxu0 0.0
        %423 = vmatprep.subr.mxu0 0.0
        %424 = vmatpush1.msra.mxu0 0.0
        %425 = vmatprep.subr.mxu0 0.0
        %426 = vmatpush1.msra.mxu0 0.0
        %427 = vmatprep.subr.mxu0 0.0
        %428 = vmatpush1.msra.mxu0 0.0
        %429 = vmatprep.subr.mxu0 0.0
        %430 = vmatpush1.msra.mxu0 0.0
        %431 = vmatprep.subr.mxu0 0.0
        %432 = vmatpush1.msra.mxu0 0.0
        %433 = vmatprep.subr.mxu0 0.0
        %434 = vmatpush1.msra.mxu0 0.0
        %435 = vmatprep.subr.mxu0 0.0
        %436 = vmatpush1.msra.mxu0 0.0
        %437 = vmatprep.subr.mxu0 0.0
        %438 = vmatpush1.msra.mxu0 0.0
        %439 = vmatprep.subr.mxu0 0.0
        %440 = vmatpush1.msra.mxu0 0.0
        %441 = vmatprep.subr.mxu0 0.0
        %442 = vmatpush1.msra.mxu0 0.0
        %443 = vmatprep.subr.mxu0 0.0
        %444 = vmatpush1.msra.mxu0 0.0
        %445 = vmatprep.subr.mxu0 0.0
        %446 = vmatpush1.msra.mxu0 0.0
        %447 = vmatprep.subr.mxu0 0.0
        %448 = vmatpush1.msra.mxu0 0.0
        %449 = vmatprep.subr.mxu0 0.0
        %450 = vmatpush1.msra.mxu0 0.0
        %451 = vmatprep.subr.mxu0 0.0
        %452 = vmatpush1.msra.mxu0 0.0
        %453 = vmatprep.subr.mxu0 0.0
        %454 = vmatpush1.msra.mxu0 0.0
        %455 = vmatprep.subr.mxu0 0.0
        %456 = vmatpush1.msra.mxu0 0.0
        %457 = vmatprep.subr.mxu0 0.0
        %458 = vmatpush1.msra.mxu0 0.0
        %459 = vmatprep.subr.mxu0 0.0
        %460 = vmatpush1.msra.mxu0 0.0
        %461 = vmatprep.subr.mxu0 0.0
        %462 = vmatpush1.msra.mxu0 0.0
        %463 = vmatprep.subr.mxu0 0.0
        %464 = vmatpush1.msra.mxu0 0.0
        %465 = vmatprep.subr.mxu0 0.0
        %466 = vmatpush1.msra.mxu0 0.0
        %467 = vmatprep.subr.mxu0 0.0
        %468 = vmatpush1.msra.mxu0 0.0
        %469 = vmatprep.subr.mxu0 0.0
        %470 = vmatpush1.msra.mxu0 0.0
        %471 = vmatprep.mubr.f32.mxu0 0.0
        %472 = vmatmul.mubr.f32.gmra.mrb[0].mxu0 %v402
        %v473 = vpop.f32.mrb[0].mxu0
        %v474 = vadd.f32 0.0, %v473
        %v475 = vpop.f32.mrb[0].mxu0
        %476 = vdwg.mxu0
        %v477 = vadd.f32 %v395, %v474
        %v478 = vld [vmem:[%s3] sm:$0xff]
        %480 = vset.pattern.permute.xlu0 0
        %481 = vperm.xlu0 %480, %v478
        %v482 = vpop.permute.xlu0 %481
        %v484 = vadd.f32 %v477, %v482
        %485 = vst [vmem:[%s221] sm:$0xff] %v484
        %s486 = sand.u32 %s136, 1
        %s487 = scalar_lea.sflag [#allocation3], %s486
        %s488 = sand.u32 %s136, 1
        %s489 = smul.addr %s488, 8
        %s490 = scalar_lea.vmem [#allocation2], %s489
        // Predicated region
        $region37: #{tpu_custom_call.1} parent=35 // pred_check
          %p491 = pneg %p146
        $region38: #{tpu_custom_call.1} parent=35 // pred_check_branch
          %493 = sbr.rel (%p491) target = $region40
        $region39: #{tpu_custom_call.1} parent=35 // pred_region
          %s495 = ssub.s32 128, 128
          %496 = vsyncadd %s487, %s495
          %s497 = sadd.s32 %s23, %s22
          %s498 = smul.addr %s497, 128
          %s499 = scalar_lea.hbm %s4, %s498
          %s501 = sshll.u32 %s490, 4
          %s502 = int_to_ptr.vmem [resolvable:$true] %s501
          %504 = dma.vmem_to_hbm [thread:$0]  %s502, 128, %s499, %s487
        $region40: #{tpu_custom_call.1} parent=35 // pred_fallthru
          _
      $region36: #{tpu_custom_call.1} parent=5 // pred_fallthru
        _
      %p505 = scmp.le.s32.totalorder 2, %s13
      // Predicated region
      $region41: #{tpu_custom_call.1} parent=5 // pred_check
        %p506 = pneg %p505
      $region42: #{tpu_custom_call.1} parent=5 // pred_check_branch
        %508 = sbr.rel (%p506) target = $region44
      $region43: #{tpu_custom_call.1} parent=5 // pred_region
        %s509 = ssub.s32 %s13, 2
        // Predicated region
        $region45: #{tpu_custom_call.1} parent=43 // pred_check
          %p510 = pneg %p152
        $region46: #{tpu_custom_call.1} parent=43 // pred_check_branch
          %512 = sbr.rel (%p510) target = $region48
        $region47: #{tpu_custom_call.1} parent=43 // pred_region
          %s513 = sand.u32 %s137, 1
          %s514 = scalar_lea.sflag [#allocation3], %s513
          %s515 = sand.u32 %s137, 1
          %s516 = smul.addr %s515, 8
          %s517 = scalar_lea.vmem [#allocation2], %s516
          %518 = dma.done %s514, 128
        $region48: #{tpu_custom_call.1} parent=43 // pred_fallthru
          _
      $region44: #{tpu_custom_call.1} parent=5 // pred_fallthru
        _
    $region6: #{tpu_custom_call.1} parent=1 // loop_footer
      %s17 = sadd.s32 1, %s13
    $region7: #{tpu_custom_call.1} parent=1 // loop_footer_branch
      %12 = sbr.rel target = $region3
    $region8: #{tpu_custom_call.1} parent=1 // loop_exit
      _
    %519 = vsyncpa [#allocation3], 1
    %s520 = scalar_lea.sflag [#allocation3], 1
    %521 = vsyncpa %s520, 1

</llo_original>
